<compile_context>
chip_gen: v6e
topology: v6e:2x2x1
jax: 0.10.0
libtpu: 0.0.40
codegen_flags: <defaults>
</compile_context>

<pallas_src>
import functools

import jax
import jax.numpy as jnp
from jax.experimental import pallas as pl
from jax.experimental.pallas import tpu as pltpu


_LANES = 1024          # lane-dense last dim (multiple of 128)
_MAX_BLOCK_ROWS = 512  # f32 tile = 512*1024*4 B = 2 MiB per block


def _analog_noise_kernel(x_ref, noise_ref, o_ref, *, k, clip_lo, clip_hi):
    # Elementwise on the VPU: upcast in-register, inject noise, round, clamp.
    xv = x_ref[...].astype(jnp.float32)
    nv = noise_ref[...].astype(jnp.float32)
    y = jnp.round(xv + xv * (nv * k))
    o_ref[...] = jnp.clip(y, clip_lo, clip_hi).astype(o_ref.dtype)


def _tiling(total):
    """Pick (cols, block_rows, rows_padded) for a lane-dense 2-D layout."""
    cols = _LANES
    rows = -(-total // cols)                                # ceil-div
    block_rows = min(_MAX_BLOCK_ROWS, ((rows + 7) // 8) * 8)  # multiple of 8
    rows_padded = -(-rows // block_rows) * block_rows
    return cols, block_rows, rows_padded


@functools.partial(jax.jit, static_argnames=("k", "clip_lo", "clip_hi"))
def _analog_gaussian_noise(x, seed, *, k, clip_lo, clip_hi):
    orig_shape = x.shape
    total = x.size
    cols, block_rows, rows_padded = _tiling(total)

    x_flat = x.reshape(-1)
    pad = rows_padded * cols - total
    if pad:
        x_flat = jnp.pad(x_flat, (0, pad))
    x2 = x_flat.reshape(rows_padded, cols)

    # bf16 noise: halves the HBM bytes of the noise operand; upcast in-kernel.
    noise2 = jax.random.normal(
        jax.random.PRNGKey(seed), (rows_padded, cols), dtype=jnp.bfloat16)

    kernel = functools.partial(
        _analog_noise_kernel, k=k, clip_lo=clip_lo, clip_hi=clip_hi)

    out2 = pl.pallas_call(
        kernel,
        out_shape=jax.ShapeDtypeStruct((rows_padded, cols), x.dtype),
        grid=(rows_padded // block_rows,),
        in_specs=[
            pl.BlockSpec((block_rows, cols), lambda i: (i, 0)),
            pl.BlockSpec((block_rows, cols), lambda i: (i, 0)),
        ],
        out_specs=pl.BlockSpec((block_rows, cols), lambda i: (i, 0)),
        compiler_params=pltpu.CompilerParams(
            dimension_semantics=("parallel",),
            vmem_limit_bytes=32 * 1024 * 1024,
        ),
        input_output_aliases={0: 0},  # write back in place over the padded slab
    )(x2, noise2)

    return out2.reshape(-1)[:total].reshape(orig_shape)


def _reference(x, seed, k, clip_lo, clip_hi):
    """Pure-jnp reference using the exact same noise draw as the kernel path."""
    total = int(x.size)
    cols, _, rows_padded = _tiling(total)
    noise = jax.random.normal(
        jax.random.PRNGKey(seed), (rows_padded, cols), dtype=jnp.bfloat16)
    noise = noise.astype(jnp.float32).reshape(-1)[:total].reshape(x.shape)
    xv = x.astype(jnp.float32)
    y = jnp.clip(jnp.round(xv + xv * (noise * k)), clip_lo, clip_hi)
    return y.astype(x.dtype)


class AnalogGaussianNoise:
    """JAX/Pallas re-implementation of dianaquantlib AnalogGaussianNoise."""

    def __init__(self, signed, bitwidth, SNR=25, std=1):
        self.signed = signed
        self.SNR_i = 1.0 / SNR
        self.sigma = float(std)
        if signed:
            self.clip_lo = float(-(2 ** (bitwidth - 1)))
            self.clip_hi = float(-self.clip_lo - 1)
        else:
            self.clip_lo = 0.0
            # NOTE: faithful to the PyTorch code: 2**bitwidth - 1
            self.clip_hi = float(2 ** bitwidth - 1)
        self.enabled = False

    def enable(self):
        self.enabled = True

    def disable(self):
        self.enabled = False

    def __call__(self, x, seed=0):
        if not self.enabled:
            return x  # identity path, no kernel launch
        return _analog_gaussian_noise(
            x, seed,
            k=self.SNR_i * self.sigma,
            clip_lo=self.clip_lo,
            clip_hi=self.clip_hi,
        )


if __name__ == "__main__":
    key = jax.random.PRNGKey(0)
    # Small NCHW input consistent with a quantized feature map (signed 8-bit grid).
    x = jnp.round(jax.random.normal(key, (2, 4, 16, 16), dtype=jnp.float32) * 60.0)

    mod = AnalogGaussianNoise(signed=True, bitwidth=8, SNR=25, std=1)

    # Disabled path: identity.
    y_disabled = mod(x)
    assert jnp.array_equal(y_disabled, x)

    # Enabled path: runs the Pallas kernel.
    mod.enable()
    y = jax.block_until_ready(mod(x, seed=1234))

    # Shape/dtype preserved; rounded integers within [clip_lo, clip_hi]; finite.
    assert y.shape == x.shape and y.dtype == x.dtype
    assert bool(jnp.all(y >= mod.clip_lo)) and bool(jnp.all(y <= mod.clip_hi))
    assert bool(jnp.all(y == jnp.round(y)))
    assert bool(jnp.all(jnp.isfinite(y)))

    # Cross-check against a pure-jnp reference that uses the same noise draw.
    # (<= 1 quantum slack covers a possible FMA-vs-separate rounding ulp
    #  landing exactly on a round-half boundary.)
    y_ref = _reference(x, 1234, mod.SNR_i * mod.sigma, mod.clip_lo, mod.clip_hi)
    assert float(jnp.max(jnp.abs(y - y_ref))) <= 1.0

    print("KERNEL_OK")
</pallas_src>

<mosaic_0001>
module attributes {stable_mosaic.version = 11 : i64} {
  func.func @_analog_noise_kernel(%arg0: i32, %arg1: memref<8x1024xf32, #tpu.memory_space<vmem>>, %arg2: memref<8x1024xbf16, #tpu.memory_space<vmem>>, %arg3: memref<8x1024xf32, #tpu.memory_space<vmem>>) attributes {dimension_semantics = [#tpu.dimension_semantics<parallel>], iteration_bounds = array<i64: 1>, scalar_prefetch = 0 : i64, scratch_operands = 0 : i64, tpu.core_type = #tpu.core_type<tc>, window_params = [{transform_indices = @transform_0, window_bounds = array<i64: 8, 1024>}, {transform_indices = @transform_1, window_bounds = array<i64: 8, 1024>}, {transform_indices = @transform_2, window_bounds = array<i64: 8, 1024>}]} {
    %c0 = arith.constant 0 : index
    %c0_0 = arith.constant 0 : index
    %0 = vector.load %arg1[%c0, %c0_0] : memref<8x1024xf32, #tpu.memory_space<vmem>>, vector<8x1024xf32>
    %c0_1 = arith.constant 0 : index
    %c0_2 = arith.constant 0 : index
    %1 = vector.load %arg2[%c0_1, %c0_2] : memref<8x1024xbf16, #tpu.memory_space<vmem>>, vector<8x1024xbf16>
    %2 = arith.extf %1 : vector<8x1024xbf16> to vector<8x1024xf32>
    %cst = arith.constant 4.000000e-02 : f32
    %3 = vector.broadcast %cst : f32 to vector<8x1024xf32>
    %4 = arith.mulf %2, %3 : vector<8x1024xf32>
    %5 = arith.mulf %0, %4 : vector<8x1024xf32>
    %6 = arith.addf %0, %5 : vector<8x1024xf32>
    %7 = math.roundeven %6 : vector<8x1024xf32>
    %cst_3 = arith.constant -1.280000e+02 : f32
    %cst_4 = arith.constant 1.270000e+02 : f32
    %8 = vector.broadcast %cst_3 : f32 to vector<8x1024xf32>
    %9 = arith.maximumf %8, %7 : vector<8x1024xf32>
    %10 = vector.broadcast %cst_4 : f32 to vector<8x1024xf32>
    %11 = arith.minimumf %10, %9 : vector<8x1024xf32>
    %c0_5 = arith.constant 0 : index
    %c0_6 = arith.constant 0 : index
    %12 = vector.load %arg3[%c0_5, %c0_6] : memref<8x1024xf32, #tpu.memory_space<vmem>>, vector<8x1024xf32>
    tpu.vector_store %arg3[%c0_5, %c0_6], %11 {strides = array<i32>} : memref<8x1024xf32, #tpu.memory_space<vmem>>, vector<8x1024xf32>,
    return
  }
  func.func @transform_0(%arg0: i32) -> (i32, i32) {
    %c0_i32 = arith.constant 0 : i32
    %c0_i32_0 = arith.constant 0 : i32
    return %arg0, %c0_i32 : i32, i32
  }
  func.func @transform_1(%arg0: i32) -> (i32, i32) {
    %c0_i32 = arith.constant 0 : i32
    %c0_i32_0 = arith.constant 0 : i32
    return %arg0, %c0_i32 : i32, i32
  }
  func.func @transform_2(%arg0: i32) -> (i32, i32) {
    %c0_i32 = arith.constant 0 : i32
    %c0_i32_0 = arith.constant 0 : i32
    return %arg0, %c0_i32 : i32, i32
  }
}

</mosaic_0001>

<llo_original>
// kernel: _analog_gaussian_noise.1
$region0: #{_analog_gaussian_noise.1}
  #allocation0 [shape = 'u32[]', space=smem, size = 0x4, offset = 0x4, fixed_abs, tag = 'smem constant byte address 0x4 - core index']
  #allocation1 [shape = 'u32[144,128]{1,0:T(1,128)}', space=vmem, size = 0x12000, scoped, tag = 'internal scratch']
  %s0 = inlined_call_operand.vmem [shape: f32[8,1024], index: 0, kind: input, shape index: {}, may-alias: {0,2}]
  %s1 = inlined_call_operand.vmem [shape: bf16[8,1024], index: 1, kind: input, shape index: {}]
  %s2 = inlined_call_operand.vmem [shape: f32[8,1024], index: 2, kind: output, shape index: {}, may-alias: {0,2}]
  %s3 = sld [smem:[#allocation0]]
  $region18: #{_analog_gaussian_noise.1} parent=0
    _
  %s5 = ssub.s32 1, %s3
  %s6 = scalar_select 0, %s5, %s3
  // Predicated region
  $region2: #{_analog_gaussian_noise.1} parent=0 // pred_check
    _
  $region3: #{_analog_gaussian_noise.1} parent=0 // pred_check_branch
    %8 = sbr.rel (0) target = $region5
  $region4: #{_analog_gaussian_noise.1} parent=0 // pred_region
    _
  $region5: #{_analog_gaussian_noise.1} parent=0 // pred_fallthru
    _
  // Predicated region
  $region6: #{_analog_gaussian_noise.1} parent=0 // pred_check
    _
  $region7: #{_analog_gaussian_noise.1} parent=0 // pred_check_branch
    %10 = sbr.rel (0) target = $region9
  $region8: #{_analog_gaussian_noise.1} parent=0 // pred_region
    _
  $region9: #{_analog_gaussian_noise.1} parent=0 // pred_fallthru
    _
  %v11 = vld [vmem:[%s0] sm:$0xff]
  %v12 = vld [vmem:[%s0 + $0x8] sm:$0xff]
  %v13 = vld [vmem:[%s0 + $0x10] sm:$0xff]
  %v14 = vld [vmem:[%s0 + $0x18] sm:$0xff]
  %v15 = vld [vmem:[%s0 + $0x20] sm:$0xff]
  %v16 = vld [vmem:[%s0 + $0x28] sm:$0xff]
  %v17 = vld [vmem:[%s0 + $0x30] sm:$0xff]
  %v18 = vld [vmem:[%s0 + $0x38] sm:$0xff]
  %v19 = vld [vmem:[%s1] sm:$0xff]
  %v20 = vld [vmem:[%s1 + $0x8] sm:$0xff]
  %v21 = vld [vmem:[%s1 + $0x10] sm:$0xff]
  %v22 = vld [vmem:[%s1 + $0x18] sm:$0xff]
  %v23 = vunpack.c.l.bf16 %v19
  %v24 = vunpack.c.h.bf16 %v19
  %v25 = vunpack.c.l.bf16 %v20
  %v26 = vunpack.c.h.bf16 %v20
  %v27 = vunpack.c.l.bf16 %v21
  %v28 = vunpack.c.h.bf16 %v21
  %v29 = vunpack.c.l.bf16 %v22
  %v30 = vunpack.c.h.bf16 %v22
  %v31 = vmul.f32 %v23, 0.04
  %v32 = vmul.f32 %v24, 0.04
  %v33 = vmul.f32 %v25, 0.04
  %v34 = vmul.f32 %v26, 0.04
  %v35 = vmul.f32 %v27, 0.04
  %v36 = vmul.f32 %v28, 0.04
  %v37 = vmul.f32 %v29, 0.04
  %v38 = vmul.f32 %v30, 0.04
  %v39 = vmul.f32 %v11, %v31
  %v40 = vmul.f32 %v12, %v32
  %v41 = vmul.f32 %v13, %v33
  %v42 = vmul.f32 %v14, %v34
  %v43 = vmul.f32 %v15, %v35
  %v44 = vmul.f32 %v16, %v36
  %v45 = vmul.f32 %v17, %v37
  %v46 = vmul.f32 %v18, %v38
  %v47 = vadd.f32 %v11, %v39
  %v48 = vadd.f32 %v12, %v40
  %v49 = vadd.f32 %v13, %v41
  %v50 = vadd.f32 %v14, %v42
  %v51 = vadd.f32 %v15, %v43
  %v52 = vadd.f32 %v16, %v44
  %v53 = vadd.f32 %v17, %v45
  %v54 = vadd.f32 %v18, %v46
  %v55 = vround.ne.pseudo %v47
  %v56 = vround.ne.pseudo %v48
  %v57 = vround.ne.pseudo %v49
  %v58 = vround.ne.pseudo %v50
  %v59 = vround.ne.pseudo %v51
  %v60 = vround.ne.pseudo %v52
  %v61 = vround.ne.pseudo %v53
  %v62 = vround.ne.pseudo %v54
  %v63 = vmax.f32 %v55, -128.0
  %v64 = vmax.f32 %v56, -128.0
  %v65 = vmax.f32 %v57, -128.0
  %v66 = vmax.f32 %v58, -128.0
  %v67 = vmax.f32 %v59, -128.0
  %v68 = vmax.f32 %v60, -128.0
  %v69 = vmax.f32 %v61, -128.0
  %v70 = vmax.f32 %v62, -128.0
  %v71 = vmin.f32 %v63, 127.0
  %v72 = vmin.f32 %v64, 127.0
  %v73 = vmin.f32 %v65, 127.0
  %v74 = vmin.f32 %v66, 127.0
  %v75 = vmin.f32 %v67, 127.0
  %v76 = vmin.f32 %v68, 127.0
  %v77 = vmin.f32 %v69, 127.0
  %v78 = vmin.f32 %v70, 127.0
  %79 = vst [vmem:[%s2] sm:$0xff] %v71
  %80 = vst [vmem:[%s2 + $0x8] sm:$0xff] %v72
  %81 = vst [vmem:[%s2 + $0x10] sm:$0xff] %v73
  %82 = vst [vmem:[%s2 + $0x18] sm:$0xff] %v74
  %83 = vst [vmem:[%s2 + $0x20] sm:$0xff] %v75
  %84 = vst [vmem:[%s2 + $0x28] sm:$0xff] %v76
  %85 = vst [vmem:[%s2 + $0x30] sm:$0xff] %v77
  %86 = vst [vmem:[%s2 + $0x38] sm:$0xff] %v78
  // Predicated region
  $region10: #{_analog_gaussian_noise.1} parent=0 // pred_check
    _
  $region11: #{_analog_gaussian_noise.1} parent=0 // pred_check_branch
    %88 = sbr.rel (0) target = $region13
  $region12: #{_analog_gaussian_noise.1} parent=0 // pred_region
    _
  $region13: #{_analog_gaussian_noise.1} parent=0 // pred_fallthru
    _
  // Predicated region
  $region14: #{_analog_gaussian_noise.1} parent=0 // pred_check
    _
  $region15: #{_analog_gaussian_noise.1} parent=0 // pred_check_branch
    %90 = sbr.rel (0) target = $region17
  $region16: #{_analog_gaussian_noise.1} parent=0 // pred_region
    _
  $region17: #{_analog_gaussian_noise.1} parent=0 // pred_fallthru
    _

</llo_original>
